<compile_context>
chip_gen: v7x
topology: tpu7x:2x2x1
jax: 0.10.0
libtpu: 0.0.40
codegen_flags: <defaults>
</compile_context>

<pallas_src>
import jax
import jax.numpy as jnp
from jax.experimental import pallas as pl
from jax.experimental.pallas import tpu as pltpu


def _round_up(x: int, m: int) -> int:
    return (x + m - 1) // m * m


def _gru3_seq_kernel(x_ref, s0_ref, aT_ref, bT_ref, z_ref, o_ref, s_scr):
    """One (batch-tile, time-step) grid point of the fused GRU-3 recurrence."""
    t = pl.program_id(1)

    # Load the initial state into the carried VMEM scratch at the first step
    # of every batch tile.
    @pl.when(t == 0)
    def _():
        s_scr[...] = s0_ref[...].astype(jnp.float32)

    s = s_scr[...]                                   # (tb, Hp) f32 carried state
    x = x_ref[0]                                     # (tb, Ip)

    # Candidate pre-activation on the MXU; accumulate in f32.
    pre = jnp.dot(s.astype(aT_ref.dtype), aT_ref[...],
                  preferred_element_type=jnp.float32)
    pre = pre + jnp.dot(x.astype(bT_ref.dtype), bT_ref[...],
                        preferred_element_type=jnp.float32)
    cand = jnp.tanh(pre)                             # EUP

    z = z_ref[...]                                   # (1, Hp) precomputed sigmoid
    new_s = s + z * (cand - s)                       # == (1-z)*s + z*cand

    s_scr[...] = new_s
    o_ref[0] = new_s.astype(o_ref.dtype)


def gru3_sequence(x_seq, state0, A_w, B_w, update_vector, *,
                  mxu_dtype=jnp.float32, block_batch=128):
    """Run the GRU_3_variant cell over a whole sequence in one pallas_call.

    x_seq:  (T, B, input_size)
    state0: (B, hidden_size)
    A_w:    (hidden_size, hidden_size)   (nn.Linear weight, bias=False)
    B_w:    (hidden_size, input_size)
    update_vector: (hidden_size,)
    returns: (T, B, hidden_size) — hidden state after each step.
    """
    T, Bsz, I = x_seq.shape
    H = state0.shape[1]

    # Lane-dense padding (last dim -> multiple of 128, sublane dim -> 8).
    Hp = _round_up(H, 128)
    Ip = _round_up(I, 128)
    tb = min(_round_up(Bsz, 8), _round_up(block_batch, 8))
    Bp = _round_up(_round_up(Bsz, 8), tb)
    nb = Bp // tb

    # One-time host-side prep (amortized over all T steps of the fused kernel).
    aT = jnp.pad(A_w.T.astype(mxu_dtype), ((0, Hp - H), (0, Hp - H)))
    bT = jnp.pad(B_w.T.astype(mxu_dtype), ((0, Ip - I), (0, Hp - H)))
    z = jnp.pad(jax.nn.sigmoid(update_vector.astype(jnp.float32)).reshape(1, H),
                ((0, 0), (0, Hp - H)))               # zero-padded lanes stay 0
    xp = jnp.pad(x_seq.astype(mxu_dtype), ((0, 0), (0, Bp - Bsz), (0, Ip - I)))
    s0 = jnp.pad(state0, ((0, Bp - Bsz), (0, Hp - H)))

    # TODO(synk): for very large hidden_size, tile the (Hp, Hp) weight over a
    # reduction grid axis instead of a single resident block (v7x 64 MiB VMEM).
    out = pl.pallas_call(
        _gru3_seq_kernel,
        out_shape=jax.ShapeDtypeStruct((T, Bp, Hp), state0.dtype),
        grid_spec=pltpu.PrefetchScalarGridSpec(
            num_scalar_prefetch=0,
            grid=(nb, T),
            in_specs=[
                pl.BlockSpec((1, tb, Ip), lambda b, t: (t, b, 0)),   # x_t
                pl.BlockSpec((tb, Hp), lambda b, t: (b, 0)),         # initial state
                pl.BlockSpec((Hp, Hp), lambda b, t: (0, 0)),         # A^T (resident)
                pl.BlockSpec((Ip, Hp), lambda b, t: (0, 0)),         # B^T (resident)
                pl.BlockSpec((1, Hp), lambda b, t: (0, 0)),          # z   (resident)
            ],
            out_specs=pl.BlockSpec((1, tb, Hp), lambda b, t: (t, b, 0)),
            scratch_shapes=[pltpu.VMEM((tb, Hp), jnp.float32)],      # carried state
        ),
        compiler_params=pltpu.CompilerParams(
            dimension_semantics=("parallel", "arbitrary")),
    )(xp, s0, aT, bT, z)

    return out[:, :Bsz, :H]


def gru3_forward(x, state, A_w, B_w, update_vector, **kw):
    """Single-step forward, identical semantics to GRU_3_variant.forward."""
    return gru3_sequence(x[None], state, A_w, B_w, update_vector, **kw)[0]


# ----------------------------- pure-JAX reference -----------------------------

def reference_step(x, s, A_w, B_w, update_vector):
    cand = jnp.tanh(s @ A_w.T + x @ B_w.T)
    z = jax.nn.sigmoid(update_vector)[None, :]
    return (1.0 - z) * s + z * cand


def reference_sequence(x_seq, s, A_w, B_w, update_vector):
    outs = []
    for t in range(x_seq.shape[0]):
        s = reference_step(x_seq[t], s, A_w, B_w, update_vector)
        outs.append(s)
    return jnp.stack(outs)


if __name__ == "__main__":
    batch, input_size, hidden_size, seq_len = 8, 16, 32, 6

    key = jax.random.PRNGKey(0)
    k_x, k_s, k_a, k_b, k_u = jax.random.split(key, 5)
    x_seq = jax.random.normal(k_x, (seq_len, batch, input_size), jnp.float32)
    state0 = jax.random.normal(k_s, (batch, hidden_size), jnp.float32)

    # nn.Linear default init U(-1/sqrt(fan_in), 1/sqrt(fan_in)), bias=False.
    bound_a = 1.0 / jnp.sqrt(hidden_size)
    bound_b = 1.0 / jnp.sqrt(input_size)
    A_w = jax.random.uniform(k_a, (hidden_size, hidden_size), jnp.float32,
                             -bound_a, bound_a)
    B_w = jax.random.uniform(k_b, (hidden_size, input_size), jnp.float32,
                             -bound_b, bound_b)
    # Module init is zeros (z = 0.5 everywhere); use a random vector here so the
    # gate path is actually exercised by the test.
    update_vector = jax.random.normal(k_u, (hidden_size,), jnp.float32)

    # 1) Single-step forward (exact module semantics), f32 MXU path.
    out_step = jax.block_until_ready(
        gru3_forward(x_seq[0], state0, A_w, B_w, update_vector))
    ref_step = reference_step(x_seq[0], state0, A_w, B_w, update_vector)
    assert out_step.shape == (batch, hidden_size)
    assert jnp.allclose(out_step, ref_step, atol=1e-5, rtol=1e-5), \
        "single-step mismatch vs reference"

    # 2) Fused recurrence over seq_len steps in a single pallas_call, f32.
    out_seq = jax.block_until_ready(
        gru3_sequence(x_seq, state0, A_w, B_w, update_vector))
    ref_seq = reference_sequence(x_seq, state0, A_w, B_w, update_vector)
    assert out_seq.shape == (seq_len, batch, hidden_size)
    assert jnp.allclose(out_seq, ref_seq, atol=1e-5, rtol=1e-5), \
        "fused-sequence mismatch vs reference"

    # 3) bf16 MXU path (native on v6e/v7x); gate/tanh math stays f32 in-kernel.
    out_bf16 = jax.block_until_ready(
        gru3_sequence(x_seq, state0, A_w, B_w, update_vector,
                      mxu_dtype=jnp.bfloat16))
    assert jnp.allclose(out_bf16, ref_seq, atol=5e-2, rtol=5e-2), \
        "bf16 fused-sequence mismatch vs reference"

    print("KERNEL_OK")
</pallas_src>

<mosaic_0001>
module attributes {stable_mosaic.version = 11 : i64} {
  func.func @_gru3_seq_kernel(%arg0: i32, %arg1: i32, %arg2: memref<1x8x128xf32, #tpu.memory_space<vmem>>, %arg3: memref<8x128xf32, #tpu.memory_space<vmem>>, %arg4: memref<128x128xf32, #tpu.memory_space<vmem>>, %arg5: memref<128x128xf32, #tpu.memory_space<vmem>>, %arg6: memref<1x128xf32, #tpu.memory_space<vmem>>, %arg7: memref<1x8x128xf32, #tpu.memory_space<vmem>>, %arg8: memref<8x128xf32, #tpu.memory_space<vmem>>) attributes {dimension_semantics = [#tpu.dimension_semantics<parallel>, #tpu.dimension_semantics<arbitrary>], iteration_bounds = array<i64: 1, 1>, scalar_prefetch = 0 : i64, scratch_operands = 1 : i64, tpu.core_type = #tpu.core_type<tc>, window_params = [{transform_indices = @transform_0, window_bounds = array<i64: 1, 8, 128>}, {transform_indices = @transform_1, window_bounds = array<i64: 8, 128>}, {pipeline_mode = #tpu.pipeline_mode<synchronous>, transform_indices = @transform_2, window_bounds = array<i64: 128, 128>}, {pipeline_mode = #tpu.pipeline_mode<synchronous>, transform_indices = @transform_3, window_bounds = array<i64: 128, 128>}, {pipeline_mode = #tpu.pipeline_mode<synchronous>, transform_indices = @transform_4, window_bounds = array<i64: 1, 128>}, {transform_indices = @transform_5, window_bounds = array<i64: 1, 8, 128>}]} {
    %c0_i32 = arith.constant 0 : i32
    %0 = arith.cmpi eq, %arg1, %c0_i32 : i32
    %1 = arith.extui %0 : i1 to i32
    %c0_i32_0 = arith.constant 0 : i32
    %2 = arith.cmpi ne, %1, %c0_i32_0 : i32
    scf.if %2 {
      %c0_17 = arith.constant 0 : index
      %c0_18 = arith.constant 0 : index
      %21 = vector.load %arg3[%c0_17, %c0_18] : memref<8x128xf32, #tpu.memory_space<vmem>>, vector<8x128xf32>
      %c0_19 = arith.constant 0 : index
      %c0_20 = arith.constant 0 : index
      %22 = vector.load %arg8[%c0_19, %c0_20] : memref<8x128xf32, #tpu.memory_space<vmem>>, vector<8x128xf32>
      tpu.vector_store %arg8[%c0_19, %c0_20], %21 {strides = array<i32>} : memref<8x128xf32, #tpu.memory_space<vmem>>, vector<8x128xf32>,
    } else {
    }
    %c0 = arith.constant 0 : index
    %c0_1 = arith.constant 0 : index
    %3 = vector.load %arg8[%c0, %c0_1] : memref<8x128xf32, #tpu.memory_space<vmem>>, vector<8x128xf32>
    %c0_2 = arith.constant 0 : index
    %c0_3 = arith.constant 0 : index
    %c0_4 = arith.constant 0 : index
    %4 = vector.load %arg2[%c0_2, %c0_3, %c0_4] : memref<1x8x128xf32, #tpu.memory_space<vmem>>, vector<1x8x128xf32>
    %5 = vector.shape_cast %4 : vector<1x8x128xf32> to vector<8x128xf32>
    %c0_5 = arith.constant 0 : index
    %c0_6 = arith.constant 0 : index
    %6 = vector.load %arg4[%c0_5, %c0_6] : memref<128x128xf32, #tpu.memory_space<vmem>>, vector<128x128xf32>
    %cst = arith.constant dense<0.000000e+00> : vector<8x128xf32>
    %7 = tpu.matmul %3, %6, %cst {dimension_numbers = #tpu.dot_dimension_numbers<[1], [0], [0], [1], [0, 0, 1, 1], [], []>} : vector<8x128xf32>, vector<128x128xf32>, vector<8x128xf32> -> vector<8x128xf32>
    %c0_7 = arith.constant 0 : index
    %c0_8 = arith.constant 0 : index
    %8 = vector.load %arg5[%c0_7, %c0_8] : memref<128x128xf32, #tpu.memory_space<vmem>>, vector<128x128xf32>
    %cst_9 = arith.constant dense<0.000000e+00> : vector<8x128xf32>
    %9 = tpu.matmul %5, %8, %cst_9 {dimension_numbers = #tpu.dot_dimension_numbers<[1], [0], [0], [1], [0, 0, 1, 1], [], []>} : vector<8x128xf32>, vector<128x128xf32>, vector<8x128xf32> -> vector<8x128xf32>
    %10 = arith.addf %7, %9 : vector<8x128xf32>
    %11 = math.tanh %10 : vector<8x128xf32>
    %c0_10 = arith.constant 0 : index
    %c0_11 = arith.constant 0 : index
    %12 = vector.load %arg6[%c0_10, %c0_11] : memref<1x128xf32, #tpu.memory_space<vmem>>, vector<1x128xf32>
    %13 = arith.subf %11, %3 : vector<8x128xf32>
    %14 = vector.broadcast %12 : vector<1x128xf32> to vector<8x128xf32>
    %15 = arith.mulf %14, %13 : vector<8x128xf32>
    %16 = arith.addf %3, %15 : vector<8x128xf32>
    %c0_12 = arith.constant 0 : index
    %c0_13 = arith.constant 0 : index
    %17 = vector.load %arg8[%c0_12, %c0_13] : memref<8x128xf32, #tpu.memory_space<vmem>>, vector<8x128xf32>
    tpu.vector_store %arg8[%c0_12, %c0_13], %16 {strides = array<i32>} : memref<8x128xf32, #tpu.memory_space<vmem>>, vector<8x128xf32>,
    %c0_14 = arith.constant 0 : index
    %c0_15 = arith.constant 0 : index
    %c0_16 = arith.constant 0 : index
    %18 = vector.load %arg7[%c0_14, %c0_15, %c0_16] : memref<1x8x128xf32, #tpu.memory_space<vmem>>, vector<1x8x128xf32>
    %19 = vector.shape_cast %18 : vector<1x8x128xf32> to vector<8x128xf32>
    %20 = vector.shape_cast %16 : vector<8x128xf32> to vector<1x8x128xf32>
    tpu.vector_store %arg7[%c0_14, %c0_15, %c0_16], %20 {strides = array<i32>} : memref<1x8x128xf32, #tpu.memory_space<vmem>>, vector<1x8x128xf32>,
    return
  }
  func.func @transform_0(%arg0: i32, %arg1: i32) -> (i32, i32, i32) {
    %c0_i32 = arith.constant 0 : i32
    %c0_i32_0 = arith.constant 0 : i32
    return %arg1, %arg0, %c0_i32 : i32, i32, i32
  }
  func.func @transform_1(%arg0: i32, %arg1: i32) -> (i32, i32) {
    %c0_i32 = arith.constant 0 : i32
    %c0_i32_0 = arith.constant 0 : i32
    return %arg0, %c0_i32 : i32, i32
  }
  func.func @transform_2(%arg0: i32, %arg1: i32) -> (i32, i32) {
    %c0_i32 = arith.constant 0 : i32
    %c0_i32_0 = arith.constant 0 : i32
    %c0_i32_1 = arith.constant 0 : i32
    return %c0_i32, %c0_i32_0 : i32, i32
  }
  func.func @transform_3(%arg0: i32, %arg1: i32) -> (i32, i32) {
    %c0_i32 = arith.constant 0 : i32
    %c0_i32_0 = arith.constant 0 : i32
    %c0_i32_1 = arith.constant 0 : i32
    return %c0_i32, %c0_i32_0 : i32, i32
  }
  func.func @transform_4(%arg0: i32, %arg1: i32) -> (i32, i32) {
    %c0_i32 = arith.constant 0 : i32
    %c0_i32_0 = arith.constant 0 : i32
    %c0_i32_1 = arith.constant 0 : i32
    return %c0_i32, %c0_i32_0 : i32, i32
  }
  func.func @transform_5(%arg0: i32, %arg1: i32) -> (i32, i32, i32) {
    %c0_i32 = arith.constant 0 : i32
    %c0_i32_0 = arith.constant 0 : i32
    return %arg1, %arg0, %c0_i32 : i32, i32, i32
  }
}

</mosaic_0001>

<llo_original>
// kernel: tpu_custom_call.1
$region0: #{tpu_custom_call.1}
  #allocation0 [shape = 'u32[]', space=smem, size = 0x4, offset = 0x4, fixed_abs, tag = 'smem constant byte address 0x4 - core index']
  #allocation1 [shape = 'u32[144,128]{1,0:T(1,128)}', space=vmem, size = 0x12000, scoped, tag = 'internal scratch']
  #allocation2 [shape = 'f32[8,128]{1,0:T(8,128)}', space=vmem, size = 0x1000, scoped, tag = 'scratch operand']
  %s0 = inlined_call_operand.hbm [shape: f32[1,8,128], index: 0, kind: input, shape index: {}]
  %s1 = inlined_call_operand.hbm [shape: f32[8,128], index: 1, kind: input, shape index: {}]
  %s2 = inlined_call_operand.hbm [shape: f32[128,128], index: 2, kind: input, shape index: {}]
  %s3 = inlined_call_operand.hbm [shape: f32[128,128], index: 3, kind: input, shape index: {}]
  %s4 = inlined_call_operand.vmem [shape: f32[1,128], index: 4, kind: input, shape index: {}]
  %s5 = inlined_call_operand.hbm [shape: f32[1,8,128], index: 5, kind: output, shape index: {}]
  %s6 = sld [smem:[#allocation0]]
  $region50: #{tpu_custom_call.1} parent=0
    _
  %s8 = ssub.s32 1, %s6
  %s9 = scalar_select 0, %s8, %s6
  $region1: #{tpu_custom_call.1} parent=0
    #allocation3 [shape = 'u8[4096]{0}', space=vmem, size = 0x1000, scoped, tag = 'input window, operand 0, single buffered']
    #allocation4 [shape = 's32[1]{0}', space=sflag, size = 0x4, scoped, tag = 'scoped memory for tpu_custom_call.1']
    #allocation5 [shape = 's32[1]{0}', space=sflag, size = 0x4, scoped, tag = 'scoped memory for tpu_custom_call.1']
    #allocation6 [shape = 'u8[4096]{0}', space=vmem, size = 0x1000, scoped, tag = 'input window, operand 1, single buffered']
    #allocation7 [shape = 's32[1]{0}', space=sflag, size = 0x4, scoped, tag = 'scoped memory for tpu_custom_call.1']
    #allocation8 [shape = 'u8[65536]{0}', space=vmem, size = 0x10000, scoped, tag = 'input window, operand 2, single buffered']
    #allocation9 [shape = 'u8[65536]{0}', space=vmem, size = 0x10000, scoped, tag = 'input window, operand 3, single buffered']
    #allocation10 [shape = 's32[1]{0}', space=sflag, size = 0x4, scoped, tag = 'scoped memory for tpu_custom_call.1']
    #allocation11 [shape = 'u8[4096]{0}', space=vmem, size = 0x1000, scoped, tag = 'output window, operand 0, single buffered']
    %10 = vsyncpa [#allocation4], 0
    %11 = vsyncpa [#allocation7], 0
    %12 = vsyncpa [#allocation10], 0
    %13 = vsyncpa [#allocation5], 0
    // Predicated region
    $region2: #{tpu_custom_call.1} parent=1 // pred_check
      _
    $region3: #{tpu_custom_call.1} parent=1 // pred_check_branch
      %15 = sbr.rel (0) target = $region5
    $region4: #{tpu_custom_call.1} parent=1 // pred_region
      %s17 = ssub.s32 128, 128
      %18 = vsyncadd [#allocation4], %s17
      %s20 = sshll.u32 [#allocation3], 4
      %s21 = int_to_ptr.vmem [resolvable:$true] %s20
      %23 = dma.hbm_to_vmem [thread:$0]  %s0, 128, %s21, [#allocation4]
    $region5: #{tpu_custom_call.1} parent=1 // pred_fallthru
      _
    // Predicated region
    $region6: #{tpu_custom_call.1} parent=1 // pred_check
      _
    $region7: #{tpu_custom_call.1} parent=1 // pred_check_branch
      %25 = sbr.rel (0) target = $region9
    $region8: #{tpu_custom_call.1} parent=1 // pred_region
      %s27 = ssub.s32 128, 128
      %28 = vsyncadd [#allocation7], %s27
      %s30 = sshll.u32 [#allocation6], 4
      %s31 = int_to_ptr.vmem [resolvable:$true] %s30
      %33 = dma.hbm_to_vmem [thread:$0]  %s1, 128, %s31, [#allocation7]
    $region9: #{tpu_custom_call.1} parent=1 // pred_fallthru
      _
    // Predicated region
    $region10: #{tpu_custom_call.1} parent=1 // pred_check
      _
    $region11: #{tpu_custom_call.1} parent=1 // pred_check_branch
      %35 = sbr.rel (0) target = $region13
    $region12: #{tpu_custom_call.1} parent=1 // pred_region
      %s37 = ssub.s32 2048, 2048
      %38 = vsyncadd [#allocation7], %s37
      %s39 = sshll.u32 [#allocation8], 4
      %s40 = int_to_ptr.vmem [resolvable:$true] %s39
      %45 = dma.hbm_to_vmem [thread:$0]  %s2, 2048, %s40, [#allocation7], 128, 128, 8
    $region13: #{tpu_custom_call.1} parent=1 // pred_fallthru
      _
    // Predicated region
    $region14: #{tpu_custom_call.1} parent=1 // pred_check
      _
    $region15: #{tpu_custom_call.1} parent=1 // pred_check_branch
      %47 = sbr.rel (0) target = $region17
    $region16: #{tpu_custom_call.1} parent=1 // pred_region
      %s49 = ssub.s32 2048, 2048
      %50 = vsyncadd [#allocation10], %s49
      %s51 = sshll.u32 [#allocation9], 4
      %s52 = int_to_ptr.vmem [resolvable:$true] %s51
      %57 = dma.hbm_to_vmem [thread:$0]  %s3, 2048, %s52, [#allocation10], 128, 128, 8
    $region17: #{tpu_custom_call.1} parent=1 // pred_fallthru
      _
    // Predicated region
    $region18: #{tpu_custom_call.1} parent=1 // pred_check
      _
    $region19: #{tpu_custom_call.1} parent=1 // pred_check_branch
      %59 = sbr.rel (0) target = $region21
    $region20: #{tpu_custom_call.1} parent=1 // pred_region
      _
    $region21: #{tpu_custom_call.1} parent=1 // pred_fallthru
      _
    // Predicated region
    $region22: #{tpu_custom_call.1} parent=1 // pred_check
      _
    $region23: #{tpu_custom_call.1} parent=1 // pred_check_branch
      %61 = sbr.rel (0) target = $region25
    $region24: #{tpu_custom_call.1} parent=1 // pred_region
      %62 = dma.done [#allocation4], 128
    $region25: #{tpu_custom_call.1} parent=1 // pred_fallthru
      _
    // Predicated region
    $region26: #{tpu_custom_call.1} parent=1 // pred_check
      _
    $region27: #{tpu_custom_call.1} parent=1 // pred_check_branch
      %64 = sbr.rel (0) target = $region29
    $region28: #{tpu_custom_call.1} parent=1 // pred_region
      %65 = dma.done [#allocation7], 128
    $region29: #{tpu_custom_call.1} parent=1 // pred_fallthru
      _
    // Predicated region
    $region30: #{tpu_custom_call.1} parent=1 // pred_check
      _
    $region31: #{tpu_custom_call.1} parent=1 // pred_check_branch
      %67 = sbr.rel (0) target = $region33
    $region32: #{tpu_custom_call.1} parent=1 // pred_region
      %68 = dma.done [#allocation7], 2048
    $region33: #{tpu_custom_call.1} parent=1 // pred_fallthru
      _
    // Predicated region
    $region34: #{tpu_custom_call.1} parent=1 // pred_check
      _
    $region35: #{tpu_custom_call.1} parent=1 // pred_check_branch
      %70 = sbr.rel (0) target = $region37
    $region36: #{tpu_custom_call.1} parent=1 // pred_region
      %71 = dma.done [#allocation10], 2048
    $region37: #{tpu_custom_call.1} parent=1 // pred_fallthru
      _
    %p72 = scmp.eq.s32.totalorder 0, 0
    // Predicated region
    $region38: #{tpu_custom_call.1} parent=1 // pred_check
      %p73 = pneg %p72
    $region39: #{tpu_custom_call.1} parent=1 // pred_check_branch
      %75 = sbr.rel (%p73) target = $region41
    $region40: #{tpu_custom_call.1} parent=1 // pred_region
      %v76 = vld [vmem:[#allocation6] sm:$0xff]
      %77 = vst [vmem:[#allocation2] sm:$0xff] %v76
    $region41: #{tpu_custom_call.1} parent=1 // pred_fallthru
      _
    %v78 = vld [vmem:[#allocation2] sm:$0xff]
    %v79 = vld [vmem:[#allocation3] sm:$0xff]
    %v80 = vld [vmem:[#allocation8] sm:$0xff]
    %v81 = vld [vmem:[#allocation8 + $0x8] sm:$0xff]
    %v82 = vld [vmem:[#allocation8 + $0x10] sm:$0xff]
    %v83 = vld [vmem:[#allocation8 + $0x18] sm:$0xff]
    %v84 = vld [vmem:[#allocation8 + $0x20] sm:$0xff]
    %v85 = vld [vmem:[#allocation8 + $0x28] sm:$0xff]
    %v86 = vld [vmem:[#allocation8 + $0x30] sm:$0xff]
    %v87 = vld [vmem:[#allocation8 + $0x38] sm:$0xff]
    %v88 = vld [vmem:[#allocation8 + $0x40] sm:$0xff]
    %v89 = vld [vmem:[#allocation8 + $0x48] sm:$0xff]
    %v90 = vld [vmem:[#allocation8 + $0x50] sm:$0xff]
    %v91 = vld [vmem:[#allocation8 + $0x58] sm:$0xff]
    %v92 = vld [vmem:[#allocation8 + $0x60] sm:$0xff]
    %v93 = vld [vmem:[#allocation8 + $0x68] sm:$0xff]
    %v94 = vld [vmem:[#allocation8 + $0x70] sm:$0xff]
    %v95 = vld [vmem:[#allocation8 + $0x78] sm:$0xff]
    %v96 = vld [vmem:[#allocation9] sm:$0xff]
    %v97 = vld [vmem:[#allocation9 + $0x8] sm:$0xff]
    %v98 = vld [vmem:[#allocation9 + $0x10] sm:$0xff]
    %v99 = vld [vmem:[#allocation9 + $0x18] sm:$0xff]
    %v100 = vld [vmem:[#allocation9 + $0x20] sm:$0xff]
    %v101 = vld [vmem:[#allocation9 + $0x28] sm:$0xff]
    %v102 = vld [vmem:[#allocation9 + $0x30] sm:$0xff]
    %v103 = vld [vmem:[#allocation9 + $0x38] sm:$0xff]
    %v104 = vld [vmem:[#allocation9 + $0x40] sm:$0xff]
    %v105 = vld [vmem:[#allocation9 + $0x48] sm:$0xff]
    %v106 = vld [vmem:[#allocation9 + $0x50] sm:$0xff]
    %v107 = vld [vmem:[#allocation9 + $0x58] sm:$0xff]
    %v108 = vld [vmem:[#allocation9 + $0x60] sm:$0xff]
    %v109 = vld [vmem:[#allocation9 + $0x68] sm:$0xff]
    %v110 = vld [vmem:[#allocation9 + $0x70] sm:$0xff]
    %v111 = vld [vmem:[#allocation9 + $0x78] sm:$0xff]
    %112 = vmatprep.subr.mxu0 0.0
    %113 = vmatpush1.msra.mxu0 %v96
    %114 = vmatprep.subr.mxu0 0.0
    %115 = vmatpush1.msra.mxu0 %v97
    %116 = vmatprep.subr.mxu0 0.0
    %117 = vmatpush1.msra.mxu0 %v98
    %118 = vmatprep.subr.mxu0 0.0
    %119 = vmatpush1.msra.mxu0 %v99
    %120 = vmatprep.subr.mxu0 0.0
    %121 = vmatpush1.msra.mxu0 %v100
    %122 = vmatprep.subr.mxu0 0.0
    %123 = vmatpush1.msra.mxu0 %v101
    %124 = vmatprep.subr.mxu0 0.0
    %125 = vmatpush1.msra.mxu0 %v102
    %126 = vmatprep.subr.mxu0 0.0
    %127 = vmatpush1.msra.mxu0 %v103
    %128 = vmatprep.subr.mxu0 0.0
    %129 = vmatpush1.msra.mxu0 %v104
    %130 = vmatprep.subr.mxu0 0.0
    %131 = vmatpush1.msra.mxu0 %v105
    %132 = vmatprep.subr.mxu0 0.0
    %133 = vmatpush1.msra.mxu0 %v106
    %134 = vmatprep.subr.mxu0 0.0
    %135 = vmatpush1.msra.mxu0 %v107
    %136 = vmatprep.subr.mxu0 0.0
    %137 = vmatpush1.msra.mxu0 %v108
    %138 = vmatprep.subr.mxu0 0.0
    %139 = vmatpush1.msra.mxu0 %v109
    %140 = vmatprep.subr.mxu0 0.0
    %141 = vmatpush1.msra.mxu0 %v110
    %142 = vmatprep.subr.mxu0 0.0
    %143 = vmatpush1.msra.mxu0 %v111
    %144 = vmatprep.subr.mxu0 0.0
    %145 = vmatpush1.msra.mxu0 0.0
    %146 = vmatprep.subr.mxu0 0.0
    %147 = vmatpush1.msra.mxu0 0.0
    %148 = vmatprep.subr.mxu0 0.0
    %149 = vmatpush1.msra.mxu0 0.0
    %150 = vmatprep.subr.mxu0 0.0
    %151 = vmatpush1.msra.mxu0 0.0
    %152 = vmatprep.subr.mxu0 0.0
    %153 = vmatpush1.msra.mxu0 0.0
    %154 = vmatprep.subr.mxu0 0.0
    %155 = vmatpush1.msra.mxu0 0.0
    %156 = vmatprep.subr.mxu0 0.0
    %157 = vmatpush1.msra.mxu0 0.0
    %158 = vmatprep.subr.mxu0 0.0
    %159 = vmatpush1.msra.mxu0 0.0
    %160 = vmatprep.subr.mxu0 0.0
    %161 = vmatpush1.msra.mxu0 0.0
    %162 = vmatprep.subr.mxu0 0.0
    %163 = vmatpush1.msra.mxu0 0.0
    %164 = vmatprep.subr.mxu0 0.0
    %165 = vmatpush1.msra.mxu0 0.0
    %166 = vmatprep.subr.mxu0 0.0
    %167 = vmatpush1.msra.mxu0 0.0
    %168 = vmatprep.subr.mxu0 0.0
    %169 = vmatpush1.msra.mxu0 0.0
    %170 = vmatprep.subr.mxu0 0.0
    %171 = vmatpush1.msra.mxu0 0.0
    %172 = vmatprep.subr.mxu0 0.0
    %173 = vmatpush1.msra.mxu0 0.0
    %174 = vmatprep.subr.mxu0 0.0
    %175 = vmatpush1.msra.mxu0 0.0
    %176 = vmatprep.mubr.f32.mxu0 0.0
    %177 = vmatmul.mubr.f32.gmra.mrb[0].mxu0 %v79
    %v178 = vpop.f32.mrb[0].mxu0
    %v179 = vadd.f32 0.0, %v178
    %v180 = vpop.f32.mrb[0].mxu0
    %181 = vdwg.mxu0
    %182 = vmatprep.subr.mxu0 0.0
    %183 = vmatpush1.msra.mxu0 %v80
    %184 = vmatprep.subr.mxu0 0.0
    %185 = vmatpush1.msra.mxu0 %v81
    %186 = vmatprep.subr.mxu0 0.0
    %187 = vmatpush1.msra.mxu0 %v82
    %188 = vmatprep.subr.mxu0 0.0
    %189 = vmatpush1.msra.mxu0 %v83
    %190 = vmatprep.subr.mxu0 0.0
    %191 = vmatpush1.msra.mxu0 %v84
    %192 = vmatprep.subr.mxu0 0.0
    %193 = vmatpush1.msra.mxu0 %v85
    %194 = vmatprep.subr.mxu0 0.0
    %195 = vmatpush1.msra.mxu0 %v86
    %196 = vmatprep.subr.mxu0 0.0
    %197 = vmatpush1.msra.mxu0 %v87
    %198 = vmatprep.subr.mxu0 0.0
    %199 = vmatpush1.msra.mxu0 %v88
    %200 = vmatprep.subr.mxu0 0.0
    %201 = vmatpush1.msra.mxu0 %v89
    %202 = vmatprep.subr.mxu0 0.0
    %203 = vmatpush1.msra.mxu0 %v90
    %204 = vmatprep.subr.mxu0 0.0
    %205 = vmatpush1.msra.mxu0 %v91
    %206 = vmatprep.subr.mxu0 0.0
    %207 = vmatpush1.msra.mxu0 %v92
    %208 = vmatprep.subr.mxu0 0.0
    %209 = vmatpush1.msra.mxu0 %v93
    %210 = vmatprep.subr.mxu0 0.0
    %211 = vmatpush1.msra.mxu0 %v94
    %212 = vmatprep.subr.mxu0 0.0
    %213 = vmatpush1.msra.mxu0 %v95
    %214 = vmatprep.subr.mxu0 0.0
    %215 = vmatpush1.msra.mxu0 0.0
    %216 = vmatprep.subr.mxu0 0.0
    %217 = vmatpush1.msra.mxu0 0.0
    %218 = vmatprep.subr.mxu0 0.0
    %219 = vmatpush1.msra.mxu0 0.0
    %220 = vmatprep.subr.mxu0 0.0
    %221 = vmatpush1.msra.mxu0 0.0
    %222 = vmatprep.subr.mxu0 0.0
    %223 = vmatpush1.msra.mxu0 0.0
    %224 = vmatprep.subr.mxu0 0.0
    %225 = vmatpush1.msra.mxu0 0.0
    %226 = vmatprep.subr.mxu0 0.0
    %227 = vmatpush1.msra.mxu0 0.0
    %228 = vmatprep.subr.mxu0 0.0
    %229 = vmatpush1.msra.mxu0 0.0
    %230 = vmatprep.subr.mxu0 0.0
    %231 = vmatpush1.msra.mxu0 0.0
    %232 = vmatprep.subr.mxu0 0.0
    %233 = vmatpush1.msra.mxu0 0.0
    %234 = vmatprep.subr.mxu0 0.0
    %235 = vmatpush1.msra.mxu0 0.0
    %236 = vmatprep.subr.mxu0 0.0
    %237 = vmatpush1.msra.mxu0 0.0
    %238 = vmatprep.subr.mxu0 0.0
    %239 = vmatpush1.msra.mxu0 0.0
    %240 = vmatprep.subr.mxu0 0.0
    %241 = vmatpush1.msra.mxu0 0.0
    %242 = vmatprep.subr.mxu0 0.0
    %243 = vmatpush1.msra.mxu0 0.0
    %244 = vmatprep.subr.mxu0 0.0
    %245 = vmatpush1.msra.mxu0 0.0
    %246 = vmatprep.mubr.f32.mxu0 0.0
    %247 = vmatmul.mubr.f32.gmra.mrb[0].mxu0 %v78
    %v248 = vpop.f32.mrb[0].mxu0
    %v249 = vadd.f32 %v179, %v248
    %v250 = vpop.f32.mrb[0].mxu0
    %251 = vdwg.mxu0
    %v252 = vtanh.pop %v249
    %v253 = vld [vmem:[%s4] sm:$0x1]
    %v254 = vsub.f32 %v252, %v78
    %v256 = vlaneseq
    %v257 = vshrl.u32 %v256, 7
    %v258 = vsub.s32 0, %v257
    %v259 = vrot.slane %v253, %v258
    %v261 = vmul.f32 %v259, %v254
    %v262 = vadd.f32 %v78, %v261
    %263 = vst [vmem:[#allocation2] sm:$0xff] %v262
    %264 = vst [vmem:[#allocation11] sm:$0xff] %v262
    // Predicated region
    $region42: #{tpu_custom_call.1} parent=1 // pred_check
      _
    $region43: #{tpu_custom_call.1} parent=1 // pred_check_branch
      %266 = sbr.rel (0) target = $region45
    $region44: #{tpu_custom_call.1} parent=1 // pred_region
      %s268 = ssub.s32 128, 128
      %269 = vsyncadd [#allocation5], %s268
      %s271 = sshll.u32 [#allocation11], 4
      %s272 = int_to_ptr.vmem [resolvable:$true] %s271
      %274 = dma.vmem_to_hbm [thread:$0]  %s272, 128, %s5, [#allocation5]
    $region45: #{tpu_custom_call.1} parent=1 // pred_fallthru
      _
    // Predicated region
    $region46: #{tpu_custom_call.1} parent=1 // pred_check
      _
    $region47: #{tpu_custom_call.1} parent=1 // pred_check_branch
      %276 = sbr.rel (0) target = $region49
    $region48: #{tpu_custom_call.1} parent=1 // pred_region
      %277 = dma.done [#allocation5], 128
    $region49: #{tpu_custom_call.1} parent=1 // pred_fallthru
      _
    %278 = vsyncpa [#allocation4], 1
    %279 = vsyncpa [#allocation7], 1
    %280 = vsyncpa [#allocation10], 1
    %281 = vsyncpa [#allocation5], 1

</llo_original>
